<compile_context>
chip_gen: v5e
topology: v5e:2x2
jax: 0.10.0
libtpu: 0.0.40
codegen_flags: <defaults>
</compile_context>

<pallas_src>
import jax
import jax.numpy as jnp
from jax.experimental import pallas as pl
from jax.experimental.pallas import tpu as pltpu


DIMS = [17, 32, 64, 32, 15, 4]


def mlp_kernel(x_ref,
               w1_ref, b1_ref,
               w2_ref, b2_ref,
               w3_ref, b3_ref,
               w4_ref, b4_ref,
               w5_ref, b5_ref,
               o_ref):
    # One batch tile of the fused 5-layer MLP: 5 MXU matmuls + VPU bias/ReLU.
    # Matmul operands are in the compute dtype (bf16 or f32); accumulation and all
    # elementwise math are f32.
    x = x_ref[...]                                                     # (TB, 17)

    h = jnp.dot(x, w1_ref[...], preferred_element_type=jnp.float32) + b1_ref[...]
    h = jnp.maximum(h, 0.0)                                            # (TB, 32) f32

    h = jnp.dot(h.astype(w2_ref.dtype), w2_ref[...],
                preferred_element_type=jnp.float32) + b2_ref[...]
    h = jnp.maximum(h, 0.0)                                            # (TB, 64) f32

    # dropout(p=0) == identity; nothing to do.

    h = jnp.dot(h.astype(w3_ref.dtype), w3_ref[...],
                preferred_element_type=jnp.float32) + b3_ref[...]
    h = jnp.maximum(h, 0.0)                                            # (TB, 32) f32

    h = jnp.dot(h.astype(w4_ref.dtype), w4_ref[...],
                preferred_element_type=jnp.float32) + b4_ref[...]
    h = jnp.maximum(h, 0.0)                                            # (TB, 15) f32

    h = jnp.dot(h.astype(w5_ref.dtype), w5_ref[...],
                preferred_element_type=jnp.float32) + b5_ref[...]

    o_ref[...] = h.astype(o_ref.dtype)                                 # (TB, 4)


def net_forward(x, params, *, tb=1024, use_bf16=True):
    """x: (B, 17) float32. params: list of (W, b) with W (in, out), b (1, out).

    Returns (B, 4) float32.
    """
    B, d_in = x.shape
    assert d_in == DIMS[0]

    compute_dtype = jnp.bfloat16 if use_bf16 else jnp.float32

    # Batch tile: multiple of 8 (sublane), capped at `tb`. Pad batch to a multiple of it.
    tb_eff = min(tb, ((B + 7) // 8) * 8)
    tb_eff = max(8, ((tb_eff + 7) // 8) * 8)
    b_pad = pl.cdiv(B, tb_eff) * tb_eff

    xb = x.astype(compute_dtype)
    if b_pad != B:
        xb = jnp.pad(xb, ((0, b_pad - B), (0, 0)))

    # Flatten args: x, then (W, b) pairs. Weights in compute dtype, biases stay f32.
    flat = [xb]
    in_specs = [pl.BlockSpec((tb_eff, DIMS[0]), lambda i: (i, 0))]
    for w, b in params:
        flat.append(w.astype(compute_dtype))
        flat.append(b.astype(jnp.float32))
        # Constant index_map: weights/biases are fetched once and stay VMEM-resident.
        in_specs.append(pl.BlockSpec(w.shape, lambda i: (0, 0)))
        in_specs.append(pl.BlockSpec(b.shape, lambda i: (0, 0)))

    out_spec = pl.BlockSpec((tb_eff, DIMS[-1]), lambda i: (i, 0))

    layer_macs = sum(DIMS[k] * DIMS[k + 1] for k in range(len(DIMS) - 1))
    weight_bytes = sum(w.size * w.dtype.itemsize + b.size * 4 for w, b in params)
    cost = pl.CostEstimate(
        flops=2 * b_pad * layer_macs,
        transcendentals=0,
        bytes_accessed=b_pad * DIMS[0] * xb.dtype.itemsize
        + b_pad * DIMS[-1] * 4
        + weight_bytes,
    )

    out = pl.pallas_call(
        mlp_kernel,
        out_shape=jax.ShapeDtypeStruct((b_pad, DIMS[-1]), jnp.float32),
        grid=(b_pad // tb_eff,),
        in_specs=in_specs,
        out_specs=out_spec,
        compiler_params=pltpu.CompilerParams(
            dimension_semantics=("parallel",),   # megacore split on v7x, no-op on v5e/v6e
        ),
        cost_estimate=cost,
    )(*flat)

    return out[:B]


def init_params(key):
    """Deterministic init matching nn.Linear shapes (Kaiming-uniform-ish)."""
    params = []
    for i in range(len(DIMS) - 1):
        fan_in, fan_out = DIMS[i], DIMS[i + 1]
        key, kw, kb = jax.random.split(key, 3)
        bound = 1.0 / jnp.sqrt(fan_in)
        w = jax.random.uniform(kw, (fan_in, fan_out), jnp.float32, -bound, bound)
        b = jax.random.uniform(kb, (1, fan_out), jnp.float32, -bound, bound)
        params.append((w, b))
    return params


def reference_forward(x, params, *, use_bf16=True):
    """Pure-JAX reference mirroring the kernel's dtype policy (bf16 matmul, f32 accum)."""
    compute_dtype = jnp.bfloat16 if use_bf16 else jnp.float32
    h = x.astype(jnp.float32)
    for i, (w, b) in enumerate(params):
        h = jnp.dot(h.astype(compute_dtype), w.astype(compute_dtype),
                    preferred_element_type=jnp.float32) + b.astype(jnp.float32)
        if i < len(params) - 1:
            h = jnp.maximum(h, 0.0)
    return h


if __name__ == "__main__":
    key = jax.random.PRNGKey(0)
    kx, kp = jax.random.split(key)

    B = 8
    x = jax.random.normal(kx, (B, DIMS[0]), dtype=jnp.float32)
    params = init_params(kp)

    out = net_forward(x, params)
    out = jax.block_until_ready(out)

    ref = reference_forward(x, params)
    assert out.shape == (B, DIMS[-1])
    assert jnp.allclose(out, ref, atol=5e-3, rtol=5e-3), (
        f"max abs err {jnp.max(jnp.abs(out - ref))}"
    )

    print("KERNEL_OK")
</pallas_src>

<mosaic_0001>
module attributes {stable_mosaic.version = 11 : i64} {
  func.func @mlp_kernel(%arg0: i32, %arg1: memref<8x17xbf16, #tpu.memory_space<vmem>>, %arg2: memref<17x32xbf16, #tpu.memory_space<vmem>>, %arg3: memref<1x32xf32, #tpu.memory_space<vmem>>, %arg4: memref<32x64xbf16, #tpu.memory_space<vmem>>, %arg5: memref<1x64xf32, #tpu.memory_space<vmem>>, %arg6: memref<64x32xbf16, #tpu.memory_space<vmem>>, %arg7: memref<1x32xf32, #tpu.memory_space<vmem>>, %arg8: memref<32x15xbf16, #tpu.memory_space<vmem>>, %arg9: memref<1x15xf32, #tpu.memory_space<vmem>>, %arg10: memref<15x4xbf16, #tpu.memory_space<vmem>>, %arg11: memref<1x4xf32, #tpu.memory_space<vmem>>, %arg12: memref<8x4xf32, #tpu.memory_space<vmem>>) attributes {dimension_semantics = [#tpu.dimension_semantics<parallel>], iteration_bounds = array<i64: 1>, scalar_prefetch = 0 : i64, scratch_operands = 0 : i64, tpu.core_type = #tpu.core_type<tc>, window_params = [{transform_indices = @transform_0, window_bounds = array<i64: 8, 17>}, {pipeline_mode = #tpu.pipeline_mode<synchronous>, transform_indices = @transform_1, window_bounds = array<i64: 17, 32>}, {pipeline_mode = #tpu.pipeline_mode<synchronous>, transform_indices = @transform_2, window_bounds = array<i64: 1, 32>}, {pipeline_mode = #tpu.pipeline_mode<synchronous>, transform_indices = @transform_3, window_bounds = array<i64: 32, 64>}, {pipeline_mode = #tpu.pipeline_mode<synchronous>, transform_indices = @transform_4, window_bounds = array<i64: 1, 64>}, {pipeline_mode = #tpu.pipeline_mode<synchronous>, transform_indices = @transform_5, window_bounds = array<i64: 64, 32>}, {pipeline_mode = #tpu.pipeline_mode<synchronous>, transform_indices = @transform_6, window_bounds = array<i64: 1, 32>}, {pipeline_mode = #tpu.pipeline_mode<synchronous>, transform_indices = @transform_7, window_bounds = array<i64: 32, 15>}, {pipeline_mode = #tpu.pipeline_mode<synchronous>, transform_indices = @transform_8, window_bounds = array<i64: 1, 15>}, {pipeline_mode = #tpu.pipeline_mode<synchronous>, transform_indices = @transform_9, window_bounds = array<i64: 15, 4>}, {pipeline_mode = #tpu.pipeline_mode<synchronous>, transform_indices = @transform_10, window_bounds = array<i64: 1, 4>}, {transform_indices = @transform_11, window_bounds = array<i64: 8, 4>}]} {
    %c0 = arith.constant 0 : index
    %c0_0 = arith.constant 0 : index
    %0 = vector.load %arg1[%c0, %c0_0] : memref<8x17xbf16, #tpu.memory_space<vmem>>, vector<8x17xbf16>
    %c0_1 = arith.constant 0 : index
    %c0_2 = arith.constant 0 : index
    %1 = vector.load %arg2[%c0_1, %c0_2] : memref<17x32xbf16, #tpu.memory_space<vmem>>, vector<17x32xbf16>
    %cst = arith.constant dense<0.000000e+00> : vector<8x32xf32>
    %2 = tpu.matmul %0, %1, %cst {dimension_numbers = #tpu.dot_dimension_numbers<[1], [0], [0], [1], [0, 0, 1, 1], [], []>} : vector<8x17xbf16>, vector<17x32xbf16>, vector<8x32xf32> -> vector<8x32xf32>
    %c0_3 = arith.constant 0 : index
    %c0_4 = arith.constant 0 : index
    %3 = vector.load %arg3[%c0_3, %c0_4] : memref<1x32xf32, #tpu.memory_space<vmem>>, vector<1x32xf32>
    %4 = vector.broadcast %3 : vector<1x32xf32> to vector<8x32xf32>
    %5 = arith.addf %2, %4 : vector<8x32xf32>
    %cst_5 = arith.constant 0.000000e+00 : f32
    %6 = vector.broadcast %cst_5 : f32 to vector<8x32xf32>
    %7 = arith.maximumf %5, %6 : vector<8x32xf32>
    %8 = arith.truncf %7 : vector<8x32xf32> to vector<8x32xbf16>
    %c0_6 = arith.constant 0 : index
    %c0_7 = arith.constant 0 : index
    %9 = vector.load %arg4[%c0_6, %c0_7] : memref<32x64xbf16, #tpu.memory_space<vmem>>, vector<32x64xbf16>
    %cst_8 = arith.constant dense<0.000000e+00> : vector<8x64xf32>
    %10 = tpu.matmul %8, %9, %cst_8 {dimension_numbers = #tpu.dot_dimension_numbers<[1], [0], [0], [1], [0, 0, 1, 1], [], []>} : vector<8x32xbf16>, vector<32x64xbf16>, vector<8x64xf32> -> vector<8x64xf32>
    %c0_9 = arith.constant 0 : index
    %c0_10 = arith.constant 0 : index
    %11 = vector.load %arg5[%c0_9, %c0_10] : memref<1x64xf32, #tpu.memory_space<vmem>>, vector<1x64xf32>
    %12 = vector.broadcast %11 : vector<1x64xf32> to vector<8x64xf32>
    %13 = arith.addf %10, %12 : vector<8x64xf32>
    %cst_11 = arith.constant 0.000000e+00 : f32
    %14 = vector.broadcast %cst_11 : f32 to vector<8x64xf32>
    %15 = arith.maximumf %13, %14 : vector<8x64xf32>
    %16 = arith.truncf %15 : vector<8x64xf32> to vector<8x64xbf16>
    %c0_12 = arith.constant 0 : index
    %c0_13 = arith.constant 0 : index
    %17 = vector.load %arg6[%c0_12, %c0_13] : memref<64x32xbf16, #tpu.memory_space<vmem>>, vector<64x32xbf16>
    %cst_14 = arith.constant dense<0.000000e+00> : vector<8x32xf32>
    %18 = tpu.matmul %16, %17, %cst_14 {dimension_numbers = #tpu.dot_dimension_numbers<[1], [0], [0], [1], [0, 0, 1, 1], [], []>} : vector<8x64xbf16>, vector<64x32xbf16>, vector<8x32xf32> -> vector<8x32xf32>
    %c0_15 = arith.constant 0 : index
    %c0_16 = arith.constant 0 : index
    %19 = vector.load %arg7[%c0_15, %c0_16] : memref<1x32xf32, #tpu.memory_space<vmem>>, vector<1x32xf32>
    %20 = vector.broadcast %19 : vector<1x32xf32> to vector<8x32xf32>
    %21 = arith.addf %18, %20 : vector<8x32xf32>
    %cst_17 = arith.constant 0.000000e+00 : f32
    %22 = vector.broadcast %cst_17 : f32 to vector<8x32xf32>
    %23 = arith.maximumf %21, %22 : vector<8x32xf32>
    %24 = arith.truncf %23 : vector<8x32xf32> to vector<8x32xbf16>
    %c0_18 = arith.constant 0 : index
    %c0_19 = arith.constant 0 : index
    %25 = vector.load %arg8[%c0_18, %c0_19] : memref<32x15xbf16, #tpu.memory_space<vmem>>, vector<32x15xbf16>
    %cst_20 = arith.constant dense<0.000000e+00> : vector<8x15xf32>
    %26 = tpu.matmul %24, %25, %cst_20 {dimension_numbers = #tpu.dot_dimension_numbers<[1], [0], [0], [1], [0, 0, 1, 1], [], []>} : vector<8x32xbf16>, vector<32x15xbf16>, vector<8x15xf32> -> vector<8x15xf32>
    %c0_21 = arith.constant 0 : index
    %c0_22 = arith.constant 0 : index
    %27 = vector.load %arg9[%c0_21, %c0_22] : memref<1x15xf32, #tpu.memory_space<vmem>>, vector<1x15xf32>
    %28 = vector.broadcast %27 : vector<1x15xf32> to vector<8x15xf32>
    %29 = arith.addf %26, %28 : vector<8x15xf32>
    %cst_23 = arith.constant 0.000000e+00 : f32
    %30 = vector.broadcast %cst_23 : f32 to vector<8x15xf32>
    %31 = arith.maximumf %29, %30 : vector<8x15xf32>
    %32 = arith.truncf %31 : vector<8x15xf32> to vector<8x15xbf16>
    %c0_24 = arith.constant 0 : index
    %c0_25 = arith.constant 0 : index
    %33 = vector.load %arg10[%c0_24, %c0_25] : memref<15x4xbf16, #tpu.memory_space<vmem>>, vector<15x4xbf16>
    %cst_26 = arith.constant dense<0.000000e+00> : vector<8x4xf32>
    %34 = tpu.matmul %32, %33, %cst_26 {dimension_numbers = #tpu.dot_dimension_numbers<[1], [0], [0], [1], [0, 0, 1, 1], [], []>} : vector<8x15xbf16>, vector<15x4xbf16>, vector<8x4xf32> -> vector<8x4xf32>
    %c0_27 = arith.constant 0 : index
    %c0_28 = arith.constant 0 : index
    %35 = vector.load %arg11[%c0_27, %c0_28] : memref<1x4xf32, #tpu.memory_space<vmem>>, vector<1x4xf32>
    %36 = vector.broadcast %35 : vector<1x4xf32> to vector<8x4xf32>
    %37 = arith.addf %34, %36 : vector<8x4xf32>
    %c0_29 = arith.constant 0 : index
    %c0_30 = arith.constant 0 : index
    %38 = vector.load %arg12[%c0_29, %c0_30] : memref<8x4xf32, #tpu.memory_space<vmem>>, vector<8x4xf32>
    tpu.vector_store %arg12[%c0_29, %c0_30], %37 {strides = array<i32>} : memref<8x4xf32, #tpu.memory_space<vmem>>, vector<8x4xf32>,
    return
  }
  func.func @transform_0(%arg0: i32) -> (i32, i32) {
    %c0_i32 = arith.constant 0 : i32
    %c0_i32_0 = arith.constant 0 : i32
    return %arg0, %c0_i32 : i32, i32
  }
  func.func @transform_1(%arg0: i32) -> (i32, i32) {
    %c0_i32 = arith.constant 0 : i32
    %c0_i32_0 = arith.constant 0 : i32
    %c0_i32_1 = arith.constant 0 : i32
    return %c0_i32, %c0_i32_0 : i32, i32
  }
  func.func @transform_2(%arg0: i32) -> (i32, i32) {
    %c0_i32 = arith.constant 0 : i32
    %c0_i32_0 = arith.constant 0 : i32
    %c0_i32_1 = arith.constant 0 : i32
    return %c0_i32, %c0_i32_0 : i32, i32
  }
  func.func @transform_3(%arg0: i32) -> (i32, i32) {
    %c0_i32 = arith.constant 0 : i32
    %c0_i32_0 = arith.constant 0 : i32
    %c0_i32_1 = arith.constant 0 : i32
    return %c0_i32, %c0_i32_0 : i32, i32
  }
  func.func @transform_4(%arg0: i32) -> (i32, i32) {
    %c0_i32 = arith.constant 0 : i32
    %c0_i32_0 = arith.constant 0 : i32
    %c0_i32_1 = arith.constant 0 : i32
    return %c0_i32, %c0_i32_0 : i32, i32
  }
  func.func @transform_5(%arg0: i32) -> (i32, i32) {
    %c0_i32 = arith.constant 0 : i32
    %c0_i32_0 = arith.constant 0 : i32
    %c0_i32_1 = arith.constant 0 : i32
    return %c0_i32, %c0_i32_0 : i32, i32
  }
  func.func @transform_6(%arg0: i32) -> (i32, i32) {
    %c0_i32 = arith.constant 0 : i32
    %c0_i32_0 = arith.constant 0 : i32
    %c0_i32_1 = arith.constant 0 : i32
    return %c0_i32, %c0_i32_0 : i32, i32
  }
  func.func @transform_7(%arg0: i32) -> (i32, i32) {
    %c0_i32 = arith.constant 0 : i32
    %c0_i32_0 = arith.constant 0 : i32
    %c0_i32_1 = arith.constant 0 : i32
    return %c0_i32, %c0_i32_0 : i32, i32
  }
  func.func @transform_8(%arg0: i32) -> (i32, i32) {
    %c0_i32 = arith.constant 0 : i32
    %c0_i32_0 = arith.constant 0 : i32
    %c0_i32_1 = arith.constant 0 : i32
    return %c0_i32, %c0_i32_0 : i32, i32
  }
  func.func @transform_9(%arg0: i32) -> (i32, i32) {
    %c0_i32 = arith.constant 0 : i32
    %c0_i32_0 = arith.constant 0 : i32
    %c0_i32_1 = arith.constant 0 : i32
    return %c0_i32, %c0_i32_0 : i32, i32
  }
  func.func @transform_10(%arg0: i32) -> (i32, i32) {
    %c0_i32 = arith.constant 0 : i32
    %c0_i32_0 = arith.constant 0 : i32
    %c0_i32_1 = arith.constant 0 : i32
    return %c0_i32, %c0_i32_0 : i32, i32
  }
  func.func @transform_11(%arg0: i32) -> (i32, i32) {
    %c0_i32 = arith.constant 0 : i32
    %c0_i32_0 = arith.constant 0 : i32
    return %arg0, %c0_i32 : i32, i32
  }
}

</mosaic_0001>

<llo_original>
// kernel: tpu_custom_call.1
$region0: #{tpu_custom_call.1}
  #allocation0 [shape = 'u32[]', space=smem, size = 0x4, offset = 0x4, fixed_abs, tag = 'smem constant byte address 0x4 - core index']
  #allocation1 [shape = 'u32[72,128]{1,0:T(1,128)}', space=vmem, size = 0x9000, scoped, tag = 'internal scratch']
  %s0 = inlined_call_operand.vmem [shape: bf16[8,17], index: 0, kind: input, shape index: {}]
  %s1 = inlined_call_operand.vmem [shape: bf16[17,32], index: 1, kind: input, shape index: {}]
  %s2 = inlined_call_operand.vmem [shape: f32[1,32], index: 2, kind: input, shape index: {}]
  %s3 = inlined_call_operand.vmem [shape: bf16[32,64], index: 3, kind: input, shape index: {}]
  %s4 = inlined_call_operand.vmem [shape: f32[1,64], index: 4, kind: input, shape index: {}]
  %s5 = inlined_call_operand.vmem [shape: bf16[64,32], index: 5, kind: input, shape index: {}]
  %s6 = inlined_call_operand.vmem [shape: f32[1,32], index: 6, kind: input, shape index: {}]
  %s7 = inlined_call_operand.vmem [shape: bf16[32,15], index: 7, kind: input, shape index: {}]
  %s8 = inlined_call_operand.vmem [shape: f32[1,15], index: 8, kind: input, shape index: {}]
  %s9 = inlined_call_operand.vmem [shape: bf16[15,4], index: 9, kind: input, shape index: {}]
  %s10 = inlined_call_operand.vmem [shape: f32[1,4], index: 10, kind: input, shape index: {}]
  %s11 = inlined_call_operand.vmem [shape: f32[8,4], index: 11, kind: output, shape index: {}]
  %s12 = sld [smem:[#allocation0]]
  $region54: #{tpu_custom_call.1} parent=0
    _
  %s14 = ssub.s32 1, %s12
  %s15 = scalar_select 0, %s14, %s12
  // Predicated region
  $region2: #{tpu_custom_call.1} parent=0 // pred_check
    _
  $region3: #{tpu_custom_call.1} parent=0 // pred_check_branch
    %17 = sbr.rel (0) target = $region5
  $region4: #{tpu_custom_call.1} parent=0 // pred_region
    _
  $region5: #{tpu_custom_call.1} parent=0 // pred_fallthru
    _
  // Predicated region
  $region6: #{tpu_custom_call.1} parent=0 // pred_check
    _
  $region7: #{tpu_custom_call.1} parent=0 // pred_check_branch
    %19 = sbr.rel (0) target = $region9
  $region8: #{tpu_custom_call.1} parent=0 // pred_region
    _
  $region9: #{tpu_custom_call.1} parent=0 // pred_fallthru
    _
  // Predicated region
  $region10: #{tpu_custom_call.1} parent=0 // pred_check
    _
  $region11: #{tpu_custom_call.1} parent=0 // pred_check_branch
    %21 = sbr.rel (0) target = $region13
  $region12: #{tpu_custom_call.1} parent=0 // pred_region
    _
  $region13: #{tpu_custom_call.1} parent=0 // pred_fallthru
    _
  // Predicated region
  $region14: #{tpu_custom_call.1} parent=0 // pred_check
    _
  $region15: #{tpu_custom_call.1} parent=0 // pred_check_branch
    %23 = sbr.rel (0) target = $region17
  $region16: #{tpu_custom_call.1} parent=0 // pred_region
    _
  $region17: #{tpu_custom_call.1} parent=0 // pred_fallthru
    _
  // Predicated region
  $region18: #{tpu_custom_call.1} parent=0 // pred_check
    _
  $region19: #{tpu_custom_call.1} parent=0 // pred_check_branch
    %25 = sbr.rel (0) target = $region21
  $region20: #{tpu_custom_call.1} parent=0 // pred_region
    _
  $region21: #{tpu_custom_call.1} parent=0 // pred_fallthru
    _
  // Predicated region
  $region22: #{tpu_custom_call.1} parent=0 // pred_check
    _
  $region23: #{tpu_custom_call.1} parent=0 // pred_check_branch
    %27 = sbr.rel (0) target = $region25
  $region24: #{tpu_custom_call.1} parent=0 // pred_region
    _
  $region25: #{tpu_custom_call.1} parent=0 // pred_fallthru
    _
  // Predicated region
  $region26: #{tpu_custom_call.1} parent=0 // pred_check
    _
  $region27: #{tpu_custom_call.1} parent=0 // pred_check_branch
    %29 = sbr.rel (0) target = $region29
  $region28: #{tpu_custom_call.1} parent=0 // pred_region
    _
  $region29: #{tpu_custom_call.1} parent=0 // pred_fallthru
    _
  // Predicated region
  $region30: #{tpu_custom_call.1} parent=0 // pred_check
    _
  $region31: #{tpu_custom_call.1} parent=0 // pred_check_branch
    %31 = sbr.rel (0) target = $region33
  $region32: #{tpu_custom_call.1} parent=0 // pred_region
    _
  $region33: #{tpu_custom_call.1} parent=0 // pred_fallthru
    _
  // Predicated region
  $region34: #{tpu_custom_call.1} parent=0 // pred_check
    _
  $region35: #{tpu_custom_call.1} parent=0 // pred_check_branch
    %33 = sbr.rel (0) target = $region37
  $region36: #{tpu_custom_call.1} parent=0 // pred_region
    _
  $region37: #{tpu_custom_call.1} parent=0 // pred_fallthru
    _
  // Predicated region
  $region38: #{tpu_custom_call.1} parent=0 // pred_check
    _
  $region39: #{tpu_custom_call.1} parent=0 // pred_check_branch
    %35 = sbr.rel (0) target = $region41
  $region40: #{tpu_custom_call.1} parent=0 // pred_region
    _
  $region41: #{tpu_custom_call.1} parent=0 // pred_fallthru
    _
  // Predicated region
  $region42: #{tpu_custom_call.1} parent=0 // pred_check
    _
  $region43: #{tpu_custom_call.1} parent=0 // pred_check_branch
    %37 = sbr.rel (0) target = $region45
  $region44: #{tpu_custom_call.1} parent=0 // pred_region
    _
  $region45: #{tpu_custom_call.1} parent=0 // pred_fallthru
    _
  %v39 = vld [vmem:[%s0] sm:$0xf]
  %v40 = vld [vmem:[%s1] sm:$0xf]
  %v41 = vld [vmem:[%s1 + $0x4] sm:$0xf]
  %v42 = vld [vmem:[%s1 + $0x8] sm:$0x1]
  %v43 = vld [vmem:[%s2] sm:$0x1]
  %v45 = vperm.slane %v43, 0
  %v50 = vunpack.c.l.b16 %v40
  %v51 = vunpack.c.l.b16 %v41
  %v52 = vunpack.c.l.b16 %v42
  %v53 = vpack.c.b16 %v51, %v50
  %v54 = vpack.c.b16 %v52, %v52
  %vm56 = vcmask 138240
  %v58 = vsel %vm56, %v39, 0
  %vm60 = vcmask 1040384
  %v61 = vsel 0, 4294967295, 65535
  %v62 = vsel %vm60, %v61, 0
  %v64 = vand.u32 %v54, %v62
  %66 = vmatpush.bf16.msra.mxu0 0
  %67 = vmatpush.bf16.msra.mxu0 0
  %68 = vmatpush.bf16.msra.mxu0 0
  %69 = vmatpush.bf16.msra.mxu0 0
  %70 = vmatpush.bf16.msra.mxu0 0
  %71 = vmatpush.bf16.msra.mxu0 0
  %72 = vmatpush.bf16.msra.mxu0 %v64
  %73 = vmatpush.bf16.msra.mxu0 %v53
  %74 = vmatmul.bf16.gmra.mxu0 %v58
  %v75 = vpop.f32.mrf.mxu0
  %v76 = vadd.f32 %v45, %v75
  %v77 = vpop.f32.mrf.mxu0
  %78 = vdwg.mxu0
  %v79 = vmax.f32 %v76, 0.0
  %v80 = vpack.c.bf16 %v79, %v79
  %v81 = vld [vmem:[%s3] sm:$0xf]
  %v82 = vld [vmem:[%s3 + $0x4] sm:$0xf]
  %v83 = vld [vmem:[%s3 + $0x8] sm:$0xf]
  %v84 = vld [vmem:[%s3 + $0xc] sm:$0xf]
  %v85 = vld [vmem:[%s4] sm:$0x1]
  %v87 = vperm.slane %v85, 0
  %v93 = vunpack.c.l.b16 %v81
  %v94 = vunpack.c.l.b16 %v82
  %v95 = vunpack.c.l.b16 %v83
  %v96 = vunpack.c.l.b16 %v84
  %v97 = vpack.c.b16 %v94, %v93
  %v98 = vpack.c.b16 %v96, %v95
  %vm101 = vcmask 261120
  %v103 = vsel %vm101, %v80, 0
  %105 = vmatpush.bf16.msra.mxu0 0
  %106 = vmatpush.bf16.msra.mxu0 0
  %107 = vmatpush.bf16.msra.mxu0 0
  %108 = vmatpush.bf16.msra.mxu0 0
  %109 = vmatpush.bf16.msra.mxu0 0
  %110 = vmatpush.bf16.msra.mxu0 0
  %111 = vmatpush.bf16.msra.mxu0 %v98
  %112 = vmatpush.bf16.msra.mxu0 %v97
  %113 = vmatmul.bf16.gmra.mxu0 %v103
  %v114 = vpop.f32.mrf.mxu0
  %v115 = vadd.f32 %v87, %v114
  %v116 = vpop.f32.mrf.mxu0
  %117 = vdwg.mxu0
  %v118 = vmax.f32 %v115, 0.0
  %v119 = vpack.c.bf16 %v118, %v118
  %v120 = vld [vmem:[%s5] sm:$0xf]
  %v121 = vld [vmem:[%s5 + $0x4] sm:$0xf]
  %v122 = vld [vmem:[%s5 + $0x8] sm:$0xf]
  %v123 = vld [vmem:[%s5 + $0xc] sm:$0xf]
  %v124 = vld [vmem:[%s5 + $0x10] sm:$0xf]
  %v125 = vld [vmem:[%s5 + $0x14] sm:$0xf]
  %v126 = vld [vmem:[%s5 + $0x18] sm:$0xf]
  %v127 = vld [vmem:[%s5 + $0x1c] sm:$0xf]
  %v128 = vld [vmem:[%s6] sm:$0x1]
  %v130 = vperm.slane %v128, 0
  %v140 = vunpack.c.l.b16 %v120
  %v141 = vunpack.c.l.b16 %v121
  %v142 = vunpack.c.l.b16 %v122
  %v143 = vunpack.c.l.b16 %v123
  %v144 = vunpack.c.l.b16 %v124
  %v145 = vunpack.c.l.b16 %v125
  %v146 = vunpack.c.l.b16 %v126
  %v147 = vunpack.c.l.b16 %v127
  %v148 = vpack.c.b16 %v141, %v140
  %v149 = vpack.c.b16 %v143, %v142
  %v150 = vpack.c.b16 %v145, %v144
  %v151 = vpack.c.b16 %v147, %v146
  %vm156 = vcmask 523264
  %v158 = vsel %vm156, %v119, 0
  %160 = vmatpush.bf16.msra.mxu0 0
  %161 = vmatpush.bf16.msra.mxu0 0
  %162 = vmatpush.bf16.msra.mxu0 0
  %163 = vmatpush.bf16.msra.mxu0 0
  %164 = vmatpush.bf16.msra.mxu0 %v151
  %165 = vmatpush.bf16.msra.mxu0 %v150
  %166 = vmatpush.bf16.msra.mxu0 %v149
  %167 = vmatpush.bf16.msra.mxu0 %v148
  %168 = vmatmul.bf16.gmra.mxu0 %v158
  %v169 = vpop.f32.mrf.mxu0
  %v170 = vadd.f32 %v130, %v169
  %v171 = vpop.f32.mrf.mxu0
  %172 = vdwg.mxu0
  %v173 = vmax.f32 %v170, 0.0
  %v174 = vpack.c.bf16 %v173, %v173
  %v175 = vld [vmem:[%s7] sm:$0xf]
  %v176 = vld [vmem:[%s7 + $0x4] sm:$0xf]
  %v177 = vld [vmem:[%s7 + $0x8] sm:$0xf]
  %v178 = vld [vmem:[%s7 + $0xc] sm:$0xf]
  %v179 = vld [vmem:[%s8] sm:$0x1]
  %v181 = vperm.slane %v179, 0
  %v187 = vunpack.c.l.b16 %v175
  %v188 = vunpack.c.l.b16 %v176
  %v189 = vunpack.c.l.b16 %v177
  %v190 = vunpack.c.l.b16 %v178
  %v191 = vpack.c.b16 %v188, %v187
  %v192 = vpack.c.b16 %v190, %v189
  %v196 = vsel %vm101, %v174, 0
  %198 = vmatpush.bf16.msra.mxu0 0
  %199 = vmatpush.bf16.msra.mxu0 0
  %200 = vmatpush.bf16.msra.mxu0 0
  %201 = vmatpush.bf16.msra.mxu0 0
  %202 = vmatpush.bf16.msra.mxu0 0
  %203 = vmatpush.bf16.msra.mxu0 0
  %204 = vmatpush.bf16.msra.mxu0 %v192
  %205 = vmatpush.bf16.msra.mxu0 %v191
  %206 = vmatmul.bf16.gmra.mxu0 %v196
  %v207 = vpop.f32.mrf.mxu0
  %v208 = vadd.f32 %v181, %v207
  %v209 = vpop.f32.mrf.mxu0
  %210 = vdwg.mxu0
  %v211 = vmax.f32 %v208, 0.0
  %v212 = vpack.c.bf16 %v211, %v211
  %v213 = vld [vmem:[%s9] sm:$0xf]
  %v214 = vld [vmem:[%s9 + $0x4] sm:$0xf]
  %v215 = vld [vmem:[%s10] sm:$0x1]
  %v217 = vperm.slane %v215, 0
  %v221 = vunpack.c.l.b16 %v213
  %v222 = vunpack.c.l.b16 %v214
  %v223 = vpack.c.b16 %v222, %v221
  %vm224 = vcmask 121856
  %v226 = vsel %vm224, %v212, 0
  %vm228 = vcmask 1046528
  %vm229 = vcmask 1047552
  %v230 = vsel %vm228, 4294967295, 65535
  %v231 = vsel %vm229, %v230, 0
  %v233 = vand.u32 %v223, %v231
  %235 = vmatpush.bf16.msra.mxu0 0
  %236 = vmatpush.bf16.msra.mxu0 0
  %237 = vmatpush.bf16.msra.mxu0 0
  %238 = vmatpush.bf16.msra.mxu0 0
  %239 = vmatpush.bf16.msra.mxu0 0
  %240 = vmatpush.bf16.msra.mxu0 0
  %241 = vmatpush.bf16.msra.mxu0 0
  %242 = vmatpush.bf16.msra.mxu0 %v233
  %243 = vmatmul.bf16.gmra.mxu0 %v226
  %v244 = vpop.f32.mrf.mxu0
  %v245 = vadd.f32 %v217, %v244
  %v246 = vpop.f32.mrf.mxu0
  %247 = vdwg.mxu0
  %vm248 = vcmask 31744
  %249 = vst.msk [vmem:[%s11] sm:$0xff] %vm248, %v245
  // Predicated region
  $region46: #{tpu_custom_call.1} parent=0 // pred_check
    _
  $region47: #{tpu_custom_call.1} parent=0 // pred_check_branch
    %251 = sbr.rel (0) target = $region49
  $region48: #{tpu_custom_call.1} parent=0 // pred_region
    _
  $region49: #{tpu_custom_call.1} parent=0 // pred_fallthru
    _
  // Predicated region
  $region50: #{tpu_custom_call.1} parent=0 // pred_check
    _
  $region51: #{tpu_custom_call.1} parent=0 // pred_check_branch
    %253 = sbr.rel (0) target = $region53
  $region52: #{tpu_custom_call.1} parent=0 // pred_region
    _
  $region53: #{tpu_custom_call.1} parent=0 // pred_fallthru
    _

</llo_original>
